<compile_context>
chip_gen: v7x
topology: tpu7x:2x2x1
jax: 0.10.0
libtpu: 0.0.40
codegen_flags: <defaults>
</compile_context>

<pallas_src>
import functools

import jax
import jax.numpy as jnp
from jax.experimental import pallas as pl
from jax.experimental.pallas import tpu as pltpu

# ----------------------------- configuration --------------------------------
NUM_NODE_FEATURES = 32   # initial_node_feature_dim
HIDDEN_DIM        = 32   # gnn_config.hidden_dim
NUM_LAYERS        = 2    # gnn_config.num_layers
OUTPUT_DIM        = 16   # readout_config.output_dim
NUM_NODES         = 64   # total nodes in the batch
NUM_GRAPHS        = 4    # FSMolBatch.num_graphs


def _round_up(x, m):
    return (x + m - 1) // m * m


# ------------------------------- kernel -------------------------------------
def _gfe_kernel(num_layers, hidden_pad,
                x_ref, wproj_ref, adj_ref, wmsg_ref, wread_ref, memb_ref,
                out_ref, pooled_ref):
    """Fused: node projection -> GNN layers -> per-state pooling -> fused readout."""
    bf16 = jnp.bfloat16

    # 1. initial node projection (Linear, bias=False); node state kept in f32.
    h = jnp.dot(x_ref[...], wproj_ref[...], preferred_element_type=jnp.float32)

    # Pool-before-readout (exact: pooling is a sum, readout is linear).
    pooled_ref[:, 0:hidden_pad] = jnp.dot(
        memb_ref[...], h.astype(bf16), preferred_element_type=jnp.float32)

    # 2. residual message-passing layers: h <- relu(A @ (h @ Wmsg) + h).
    for l in range(num_layers):
        msg = jnp.dot(h.astype(bf16), wmsg_ref[l],
                      preferred_element_type=jnp.float32)
        agg = jnp.dot(adj_ref[...], msg.astype(bf16),
                      preferred_element_type=jnp.float32)
        h = jnp.maximum(agg + h, 0.0)              # residual add + relu in f32
        pooled_ref[:, (l + 1) * hidden_pad:(l + 2) * hidden_pad] = jnp.dot(
            memb_ref[...], h.astype(bf16), preferred_element_type=jnp.float32)

    # 3. use_all_states readout: concat(pooled states) @ Wread as ONE MXU
    #    contraction (K = (L+1)*Hp), lane-dense [Gp, OUTp] output store.
    out_ref[...] = jnp.dot(pooled_ref[...].astype(bf16), wread_ref[...],
                           preferred_element_type=jnp.float32)


# ------------------------------- wrapper -------------------------------------
def graph_feature_extractor(node_features, w_proj, adjacency, w_msg, w_read,
                            membership):
    """Pads to lane/sublane-dense shapes, casts matmul operands to bf16 and
    runs a single gridless pallas_call (everything fits VMEM at these sizes)."""
    N, D0 = node_features.shape
    H = w_proj.shape[1]
    L = w_msg.shape[0]
    OUT = w_read.shape[-1]
    G = membership.shape[0]

    Np = _round_up(N, 128)      # lane-dense adjacency / membership columns
    Hp = _round_up(H, 128)      # lane-dense hidden states
    OUTp = _round_up(OUT, 128)  # lane-dense output stores (no vst.msk)
    Gp = _round_up(G, 8)        # full sublane output tile

    bf16 = jnp.bfloat16
    # Zero padding is exact: padded nodes have zero features, zero adjacency
    # rows/cols and zero membership columns, padded graphs have zero rows.
    x_p = jnp.zeros((Np, D0), bf16).at[:N, :].set(node_features.astype(bf16))
    wproj_p = jnp.zeros((D0, Hp), bf16).at[:, :H].set(w_proj.astype(bf16))
    adj_p = jnp.zeros((Np, Np), bf16).at[:N, :N].set(adjacency.astype(bf16))
    wmsg_p = jnp.zeros((L, Hp, Hp), bf16).at[:, :H, :H].set(w_msg.astype(bf16))
    # Fused readout weights: [(L+1)*Hp, OUTp], state l at rows [l*Hp, l*Hp+H).
    wread_p = jnp.zeros(((L + 1) * Hp, OUTp), bf16)
    for l in range(L + 1):
        wread_p = wread_p.at[l * Hp:l * Hp + H, :OUT].set(w_read[l].astype(bf16))
    memb_p = jnp.zeros((Gp, Np), bf16).at[:G, :N].set(membership.astype(bf16))

    vmem = pl.BlockSpec(memory_space=pltpu.MemorySpace.VMEM)
    out_padded = pl.pallas_call(
        functools.partial(_gfe_kernel, L, Hp),
        out_shape=jax.ShapeDtypeStruct((Gp, OUTp), jnp.float32),
        in_specs=[vmem] * 6,
        out_specs=vmem,
        scratch_shapes=[pltpu.VMEM((Gp, (L + 1) * Hp), jnp.float32)],
    )(x_p, wproj_p, adj_p, wmsg_p, wread_p, memb_p)
    return out_padded[:G, :OUT]


# --------------------------- pure-JAX references ------------------------------
def _reference_f32(node_features, w_proj, adjacency, w_msg, w_read, membership):
    """Exact PyTorch-forward semantics in f32 (concat-all-states readout)."""
    h = node_features @ w_proj
    states = [h]
    for l in range(w_msg.shape[0]):
        h = jnp.maximum(adjacency @ (h @ w_msg[l]) + h, 0.0)
        states.append(h)
    node_repr = jnp.concatenate(states, axis=-1)            # use_all_states=True
    w_cat = jnp.concatenate(list(w_read), axis=0)           # [(L+1)*H, OUT]
    return membership @ (node_repr @ w_cat)                 # sum-pool readout


def _reference_mixed(node_features, w_proj, adjacency, w_msg, w_read, membership):
    """Same bf16-operand / f32-accumulate recipe as the kernel (tight check)."""
    bf = jnp.bfloat16
    dot = lambda a, b: jnp.dot(a.astype(bf), b.astype(bf),
                               preferred_element_type=jnp.float32)
    h = dot(node_features, w_proj)
    pooled = [dot(membership, h)]
    for l in range(w_msg.shape[0]):
        msg = dot(h, w_msg[l])
        agg = dot(adjacency, msg)
        h = jnp.maximum(agg + h, 0.0)
        pooled.append(dot(membership, h))
    out = jnp.zeros((membership.shape[0], w_read.shape[-1]), jnp.float32)
    for l in range(w_msg.shape[0] + 1):
        out = out + dot(pooled[l], w_read[l])
    return out


# --------------------------------- main --------------------------------------
if __name__ == "__main__":
    key = jax.random.PRNGKey(0)
    k_x, k_wp, k_adj, k_wm, k_wr = jax.random.split(key, 5)

    # FSMolBatch.node_features : [N, NUM_NODE_FEATURES]
    node_features = jax.random.normal(
        k_x, (NUM_NODES, NUM_NODE_FEATURES), dtype=jnp.float32)

    # deterministic synthetic parameters
    w_proj = jax.random.normal(
        k_wp, (NUM_NODE_FEATURES, HIDDEN_DIM), dtype=jnp.float32) * 0.1
    w_msg = jax.random.normal(
        k_wm, (NUM_LAYERS, HIDDEN_DIM, HIDDEN_DIM), dtype=jnp.float32) * 0.1
    # use_all_states=True -> readout input dim = (L+1)*H, stored split per state
    w_read = jax.random.normal(
        k_wr, (NUM_LAYERS + 1, HIDDEN_DIM, OUTPUT_DIM), dtype=jnp.float32) * 0.1

    # dense symmetric 0/1 adjacency (single edge type)
    adj_rand = jax.random.uniform(k_adj, (NUM_NODES, NUM_NODES))
    adjacency = (adj_rand < 0.1).astype(jnp.float32)
    adjacency = jnp.maximum(adjacency, adjacency.T)
    adjacency = adjacency * (1.0 - jnp.eye(NUM_NODES, dtype=jnp.float32))

    # FSMolBatch.node_to_graph -> one-hot membership [num_graphs, N]
    node_to_graph = jnp.arange(NUM_NODES, dtype=jnp.int32) % NUM_GRAPHS
    membership = jax.nn.one_hot(node_to_graph, NUM_GRAPHS,
                                dtype=jnp.float32).T  # [G, N]

    mol_reprs = graph_feature_extractor(
        node_features, w_proj, adjacency, w_msg, w_read, membership)
    mol_reprs = jax.block_until_ready(mol_reprs)
    assert mol_reprs.shape == (NUM_GRAPHS, OUTPUT_DIM)

    # Tight check vs. a JAX reference using the identical bf16/f32 recipe.
    ref_mixed = _reference_mixed(
        node_features, w_proj, adjacency, w_msg, w_read, membership)
    assert jnp.allclose(mol_reprs, ref_mixed, atol=2e-3, rtol=2e-3), \
        float(jnp.max(jnp.abs(mol_reprs - ref_mixed)))

    # Loose semantic check vs. the pure-f32 PyTorch-equivalent forward
    # (difference is only bf16 operand rounding).
    ref_f32 = _reference_f32(
        node_features, w_proj, adjacency, w_msg, w_read, membership)
    assert jnp.allclose(mol_reprs, ref_f32, atol=1e-1, rtol=1e-1), \
        float(jnp.max(jnp.abs(mol_reprs - ref_f32)))

    print("KERNEL_OK")
</pallas_src>

<mosaic_0001>
module attributes {stable_mosaic.version = 11 : i64} {
  func.func @_gfe_kernel(%arg0: memref<128x32xbf16, #tpu.memory_space<vmem>>, %arg1: memref<32x128xbf16, #tpu.memory_space<vmem>>, %arg2: memref<128x128xbf16, #tpu.memory_space<vmem>>, %arg3: memref<2x128x128xbf16, #tpu.memory_space<vmem>>, %arg4: memref<384x128xbf16, #tpu.memory_space<vmem>>, %arg5: memref<8x128xbf16, #tpu.memory_space<vmem>>, %arg6: memref<8x128xf32, #tpu.memory_space<vmem>>, %arg7: memref<8x384xf32, #tpu.memory_space<vmem>>) attributes {dimension_semantics = [], scalar_prefetch = 0 : i64, scratch_operands = 1 : i64, tpu.core_type = #tpu.core_type<tc>} {
    %c0 = arith.constant 0 : index
    %c0_0 = arith.constant 0 : index
    %0 = vector.load %arg0[%c0, %c0_0] : memref<128x32xbf16, #tpu.memory_space<vmem>>, vector<128x32xbf16>
    %c0_1 = arith.constant 0 : index
    %c0_2 = arith.constant 0 : index
    %1 = vector.load %arg1[%c0_1, %c0_2] : memref<32x128xbf16, #tpu.memory_space<vmem>>, vector<32x128xbf16>
    %cst = arith.constant dense<0.000000e+00> : vector<128x128xf32>
    %2 = tpu.matmul %0, %1, %cst {dimension_numbers = #tpu.dot_dimension_numbers<[1], [0], [0], [1], [0, 0, 1, 1], [], []>} : vector<128x32xbf16>, vector<32x128xbf16>, vector<128x128xf32> -> vector<128x128xf32>
    %c0_3 = arith.constant 0 : index
    %c0_4 = arith.constant 0 : index
    %3 = vector.load %arg5[%c0_3, %c0_4] : memref<8x128xbf16, #tpu.memory_space<vmem>>, vector<8x128xbf16>
    %4 = arith.truncf %2 : vector<128x128xf32> to vector<128x128xbf16>
    %cst_5 = arith.constant dense<0.000000e+00> : vector<8x128xf32>
    %5 = tpu.matmul %3, %4, %cst_5 {dimension_numbers = #tpu.dot_dimension_numbers<[1], [0], [0], [1], [0, 0, 1, 1], [], []>} : vector<8x128xbf16>, vector<128x128xbf16>, vector<8x128xf32> -> vector<8x128xf32>
    %c0_6 = arith.constant 0 : index
    %c0_7 = arith.constant 0 : index
    %6 = vector.load %arg7[%c0_6, %c0_7] : memref<8x384xf32, #tpu.memory_space<vmem>>, vector<8x128xf32>
    tpu.vector_store %arg7[%c0_6, %c0_7], %5 {strides = array<i32>} : memref<8x384xf32, #tpu.memory_space<vmem>>, vector<8x128xf32>,
    %7 = arith.truncf %2 : vector<128x128xf32> to vector<128x128xbf16>
    %c0_8 = arith.constant 0 : index
    %c0_9 = arith.constant 0 : index
    %c0_10 = arith.constant 0 : index
    %8 = vector.load %arg3[%c0_8, %c0_9, %c0_10] : memref<2x128x128xbf16, #tpu.memory_space<vmem>>, vector<1x128x128xbf16>
    %9 = vector.shape_cast %8 : vector<1x128x128xbf16> to vector<128x128xbf16>
    %cst_11 = arith.constant dense<0.000000e+00> : vector<128x128xf32>
    %10 = tpu.matmul %7, %9, %cst_11 {dimension_numbers = #tpu.dot_dimension_numbers<[1], [0], [0], [1], [0, 0, 1, 1], [], []>} : vector<128x128xbf16>, vector<128x128xbf16>, vector<128x128xf32> -> vector<128x128xf32>
    %c0_12 = arith.constant 0 : index
    %c0_13 = arith.constant 0 : index
    %11 = vector.load %arg2[%c0_12, %c0_13] : memref<128x128xbf16, #tpu.memory_space<vmem>>, vector<128x128xbf16>
    %12 = arith.truncf %10 : vector<128x128xf32> to vector<128x128xbf16>
    %cst_14 = arith.constant dense<0.000000e+00> : vector<128x128xf32>
    %13 = tpu.matmul %11, %12, %cst_14 {dimension_numbers = #tpu.dot_dimension_numbers<[1], [0], [0], [1], [0, 0, 1, 1], [], []>} : vector<128x128xbf16>, vector<128x128xbf16>, vector<128x128xf32> -> vector<128x128xf32>
    %14 = arith.addf %13, %2 : vector<128x128xf32>
    %cst_15 = arith.constant 0.000000e+00 : f32
    %15 = vector.broadcast %cst_15 : f32 to vector<128x128xf32>
    %16 = arith.maximumf %14, %15 : vector<128x128xf32>
    %c0_16 = arith.constant 0 : index
    %c0_17 = arith.constant 0 : index
    %17 = vector.load %arg5[%c0_16, %c0_17] : memref<8x128xbf16, #tpu.memory_space<vmem>>, vector<8x128xbf16>
    %18 = arith.truncf %16 : vector<128x128xf32> to vector<128x128xbf16>
    %cst_18 = arith.constant dense<0.000000e+00> : vector<8x128xf32>
    %19 = tpu.matmul %17, %18, %cst_18 {dimension_numbers = #tpu.dot_dimension_numbers<[1], [0], [0], [1], [0, 0, 1, 1], [], []>} : vector<8x128xbf16>, vector<128x128xbf16>, vector<8x128xf32> -> vector<8x128xf32>
    %c0_19 = arith.constant 0 : index
    %c128 = arith.constant 128 : index
    %20 = vector.load %arg7[%c0_19, %c128] : memref<8x384xf32, #tpu.memory_space<vmem>>, vector<8x128xf32>
    tpu.vector_store %arg7[%c0_19, %c128], %19 {strides = array<i32>} : memref<8x384xf32, #tpu.memory_space<vmem>>, vector<8x128xf32>,
    %21 = arith.truncf %16 : vector<128x128xf32> to vector<128x128xbf16>
    %c1 = arith.constant 1 : index
    %c0_20 = arith.constant 0 : index
    %c0_21 = arith.constant 0 : index
    %22 = vector.load %arg3[%c1, %c0_20, %c0_21] : memref<2x128x128xbf16, #tpu.memory_space<vmem>>, vector<1x128x128xbf16>
    %23 = vector.shape_cast %22 : vector<1x128x128xbf16> to vector<128x128xbf16>
    %cst_22 = arith.constant dense<0.000000e+00> : vector<128x128xf32>
    %24 = tpu.matmul %21, %23, %cst_22 {dimension_numbers = #tpu.dot_dimension_numbers<[1], [0], [0], [1], [0, 0, 1, 1], [], []>} : vector<128x128xbf16>, vector<128x128xbf16>, vector<128x128xf32> -> vector<128x128xf32>
    %c0_23 = arith.constant 0 : index
    %c0_24 = arith.constant 0 : index
    %25 = vector.load %arg2[%c0_23, %c0_24] : memref<128x128xbf16, #tpu.memory_space<vmem>>, vector<128x128xbf16>
    %26 = arith.truncf %24 : vector<128x128xf32> to vector<128x128xbf16>
    %cst_25 = arith.constant dense<0.000000e+00> : vector<128x128xf32>
    %27 = tpu.matmul %25, %26, %cst_25 {dimension_numbers = #tpu.dot_dimension_numbers<[1], [0], [0], [1], [0, 0, 1, 1], [], []>} : vector<128x128xbf16>, vector<128x128xbf16>, vector<128x128xf32> -> vector<128x128xf32>
    %28 = arith.addf %27, %16 : vector<128x128xf32>
    %cst_26 = arith.constant 0.000000e+00 : f32
    %29 = vector.broadcast %cst_26 : f32 to vector<128x128xf32>
    %30 = arith.maximumf %28, %29 : vector<128x128xf32>
    %c0_27 = arith.constant 0 : index
    %c0_28 = arith.constant 0 : index
    %31 = vector.load %arg5[%c0_27, %c0_28] : memref<8x128xbf16, #tpu.memory_space<vmem>>, vector<8x128xbf16>
    %32 = arith.truncf %30 : vector<128x128xf32> to vector<128x128xbf16>
    %cst_29 = arith.constant dense<0.000000e+00> : vector<8x128xf32>
    %33 = tpu.matmul %31, %32, %cst_29 {dimension_numbers = #tpu.dot_dimension_numbers<[1], [0], [0], [1], [0, 0, 1, 1], [], []>} : vector<8x128xbf16>, vector<128x128xbf16>, vector<8x128xf32> -> vector<8x128xf32>
    %c0_30 = arith.constant 0 : index
    %c256 = arith.constant 256 : index
    %34 = vector.load %arg7[%c0_30, %c256] : memref<8x384xf32, #tpu.memory_space<vmem>>, vector<8x128xf32>
    tpu.vector_store %arg7[%c0_30, %c256], %33 {strides = array<i32>} : memref<8x384xf32, #tpu.memory_space<vmem>>, vector<8x128xf32>,
    %c0_31 = arith.constant 0 : index
    %c0_32 = arith.constant 0 : index
    %35 = vector.load %arg7[%c0_31, %c0_32] : memref<8x384xf32, #tpu.memory_space<vmem>>, vector<8x384xf32>
    %36 = arith.truncf %35 : vector<8x384xf32> to vector<8x384xbf16>
    %c0_33 = arith.constant 0 : index
    %c0_34 = arith.constant 0 : index
    %37 = vector.load %arg4[%c0_33, %c0_34] : memref<384x128xbf16, #tpu.memory_space<vmem>>, vector<384x128xbf16>
    %cst_35 = arith.constant dense<0.000000e+00> : vector<8x128xf32>
    %38 = tpu.matmul %36, %37, %cst_35 {dimension_numbers = #tpu.dot_dimension_numbers<[1], [0], [0], [1], [0, 0, 1, 1], [], []>} : vector<8x384xbf16>, vector<384x128xbf16>, vector<8x128xf32> -> vector<8x128xf32>
    %c0_36 = arith.constant 0 : index
    %c0_37 = arith.constant 0 : index
    %39 = vector.load %arg6[%c0_36, %c0_37] : memref<8x128xf32, #tpu.memory_space<vmem>>, vector<8x128xf32>
    tpu.vector_store %arg6[%c0_36, %c0_37], %38 {strides = array<i32>} : memref<8x128xf32, #tpu.memory_space<vmem>>, vector<8x128xf32>,
    return
  }
}

</mosaic_0001>

<llo_original>
// kernel: tpu_custom_call.1
$region0: #{tpu_custom_call.1}
  #allocation0 [shape = 'u32[]', space=smem, size = 0x4, offset = 0x4, fixed_abs, tag = 'smem constant byte address 0x4 - core index']
  #allocation1 [shape = 'u32[144,128]{1,0:T(1,128)}', space=vmem, size = 0x12000, scoped, tag = 'internal scratch']
  #allocation2 [shape = 'f32[8,384]{1,0:T(8,128)}', space=vmem, size = 0x3000, scoped, tag = 'scratch operand']
  %s0 = inlined_call_operand.vmem [shape: bf16[128,32], index: 0, kind: input, shape index: {}]
  %s1 = inlined_call_operand.vmem [shape: bf16[32,128], index: 1, kind: input, shape index: {}]
  %s2 = inlined_call_operand.vmem [shape: bf16[128,128], index: 2, kind: input, shape index: {}]
  %s3 = inlined_call_operand.hbm [shape: bf16[2,128,128], index: 3, kind: input, shape index: {}]
  %s4 = inlined_call_operand.hbm [shape: bf16[384,128], index: 4, kind: input, shape index: {}]
  %s5 = inlined_call_operand.vmem [shape: bf16[8,128], index: 5, kind: input, shape index: {}]
  %s6 = inlined_call_operand.hbm [shape: f32[8,128], index: 6, kind: output, shape index: {}]
  %s7 = sld [smem:[#allocation0]]
  $region42: #{tpu_custom_call.1} parent=0
    _
  %s9 = ssub.s32 1, %s7
  %s10 = scalar_select 0, %s9, %s7
  $region1: #{tpu_custom_call.1} parent=0
    #allocation3 [shape = 'u8[65536]{0}', space=vmem, size = 0x10000, scoped, tag = 'input window, operand 3, single buffered']
    #allocation4 [shape = 's32[1]{0}', space=sflag, size = 0x4, scoped, tag = 'scoped memory for tpu_custom_call.1']
    #allocation5 [shape = 's32[1]{0}', space=sflag, size = 0x4, scoped, tag = 'scoped memory for tpu_custom_call.1']
    #allocation6 [shape = 'u8[98304]{0}', space=vmem, size = 0x18000, scoped, tag = 'input window, operand 4, single buffered']
    #allocation7 [shape = 's32[1]{0}', space=sflag, size = 0x4, scoped, tag = 'scoped memory for tpu_custom_call.1']
    #allocation8 [shape = 'u8[4096]{0}', space=vmem, size = 0x1000, scoped, tag = 'output window, operand 0, single buffered']
    %11 = vsyncpa [#allocation4], 0
    %12 = vsyncpa [#allocation7], 0
    %13 = vsyncpa [#allocation5], 0
    // Predicated region
    $region2: #{tpu_custom_call.1} parent=1 // pred_check
      _
    $region3: #{tpu_custom_call.1} parent=1 // pred_check_branch
      %15 = sbr.rel (0) target = $region5
    $region4: #{tpu_custom_call.1} parent=1 // pred_region
      _
    $region5: #{tpu_custom_call.1} parent=1 // pred_fallthru
      _
    // Predicated region
    $region6: #{tpu_custom_call.1} parent=1 // pred_check
      _
    $region7: #{tpu_custom_call.1} parent=1 // pred_check_branch
      %17 = sbr.rel (0) target = $region9
    $region8: #{tpu_custom_call.1} parent=1 // pred_region
      _
    $region9: #{tpu_custom_call.1} parent=1 // pred_fallthru
      _
    // Predicated region
    $region10: #{tpu_custom_call.1} parent=1 // pred_check
      _
    $region11: #{tpu_custom_call.1} parent=1 // pred_check_branch
      %19 = sbr.rel (0) target = $region13
    $region12: #{tpu_custom_call.1} parent=1 // pred_region
      _
    $region13: #{tpu_custom_call.1} parent=1 // pred_fallthru
      _
    // Predicated region
    $region14: #{tpu_custom_call.1} parent=1 // pred_check
      _
    $region15: #{tpu_custom_call.1} parent=1 // pred_check_branch
      %21 = sbr.rel (0) target = $region17
    $region16: #{tpu_custom_call.1} parent=1 // pred_region
      %s23 = ssub.s32 2048, 2048
      %24 = vsyncadd [#allocation4], %s23
      %s25 = sshll.u32 [#allocation3], 4
      %s26 = int_to_ptr.vmem [resolvable:$true] %s25
      %31 = dma.hbm_to_vmem [thread:$0]  %s3, 2048, %s26, [#allocation4], 64, 64, 4
    $region17: #{tpu_custom_call.1} parent=1 // pred_fallthru
      _
    // Predicated region
    $region18: #{tpu_custom_call.1} parent=1 // pred_check
      _
    $region19: #{tpu_custom_call.1} parent=1 // pred_check_branch
      %33 = sbr.rel (0) target = $region21
    $region20: #{tpu_custom_call.1} parent=1 // pred_region
      %s35 = ssub.s32 3072, 3072
      %36 = vsyncadd [#allocation7], %s35
      %s37 = sshll.u32 [#allocation6], 4
      %s38 = int_to_ptr.vmem [resolvable:$true] %s37
      %43 = dma.hbm_to_vmem [thread:$0]  %s4, 3072, %s38, [#allocation7], 64, 64, 4
    $region21: #{tpu_custom_call.1} parent=1 // pred_fallthru
      _
    // Predicated region
    $region22: #{tpu_custom_call.1} parent=1 // pred_check
      _
    $region23: #{tpu_custom_call.1} parent=1 // pred_check_branch
      %45 = sbr.rel (0) target = $region25
    $region24: #{tpu_custom_call.1} parent=1 // pred_region
      _
    $region25: #{tpu_custom_call.1} parent=1 // pred_fallthru
      _
    // Predicated region
    $region26: #{tpu_custom_call.1} parent=1 // pred_check
      _
    $region27: #{tpu_custom_call.1} parent=1 // pred_check_branch
      %47 = sbr.rel (0) target = $region29
    $region28: #{tpu_custom_call.1} parent=1 // pred_region
      %48 = dma.done [#allocation4], 2048
    $region29: #{tpu_custom_call.1} parent=1 // pred_fallthru
      _
    // Predicated region
    $region30: #{tpu_custom_call.1} parent=1 // pred_check
      _
    $region31: #{tpu_custom_call.1} parent=1 // pred_check_branch
      %50 = sbr.rel (0) target = $region33
    $region32: #{tpu_custom_call.1} parent=1 // pred_region
      %51 = dma.done [#allocation7], 3072
    $region33: #{tpu_custom_call.1} parent=1 // pred_fallthru
      _
    %v53 = vld [vmem:[%s0] sm:$0xf]
    %v54 = vld [vmem:[%s0 + $0x4] sm:$0xf]
    %v55 = vld [vmem:[%s0 + $0x8] sm:$0xf]
    %v56 = vld [vmem:[%s0 + $0xc] sm:$0xf]
    %v57 = vld [vmem:[%s0 + $0x10] sm:$0xf]
    %v58 = vld [vmem:[%s0 + $0x14] sm:$0xf]
    %v59 = vld [vmem:[%s0 + $0x18] sm:$0xf]
    %v60 = vld [vmem:[%s0 + $0x1c] sm:$0xf]
    %v61 = vld [vmem:[%s0 + $0x20] sm:$0xf]
    %v62 = vld [vmem:[%s0 + $0x24] sm:$0xf]
    %v63 = vld [vmem:[%s0 + $0x28] sm:$0xf]
    %v64 = vld [vmem:[%s0 + $0x2c] sm:$0xf]
    %v65 = vld [vmem:[%s0 + $0x30] sm:$0xf]
    %v66 = vld [vmem:[%s0 + $0x34] sm:$0xf]
    %v67 = vld [vmem:[%s0 + $0x38] sm:$0xf]
    %v68 = vld [vmem:[%s0 + $0x3c] sm:$0xf]
    %v69 = vld [vmem:[%s1] sm:$0xf]
    %v70 = vld [vmem:[%s1 + $0x4] sm:$0xf]
    %v71 = vld [vmem:[%s1 + $0x8] sm:$0xf]
    %v72 = vld [vmem:[%s1 + $0xc] sm:$0xf]
    %v89 = vunpack.c.l.b16 %v53
    %v90 = vunpack.c.l.b16 %v54
    %v91 = vunpack.c.l.b16 %v55
    %v92 = vunpack.c.l.b16 %v56
    %v93 = vunpack.c.l.b16 %v57
    %v94 = vunpack.c.l.b16 %v58
    %v95 = vunpack.c.l.b16 %v59
    %v96 = vunpack.c.l.b16 %v60
    %v97 = vunpack.c.l.b16 %v61
    %v98 = vunpack.c.l.b16 %v62
    %v99 = vunpack.c.l.b16 %v63
    %v100 = vunpack.c.l.b16 %v64
    %v101 = vunpack.c.l.b16 %v65
    %v102 = vunpack.c.l.b16 %v66
    %v103 = vunpack.c.l.b16 %v67
    %v104 = vunpack.c.l.b16 %v68
    %v105 = vpack.c.b16 %v90, %v89
    %v106 = vpack.c.b16 %v92, %v91
    %v107 = vpack.c.b16 %v94, %v93
    %v108 = vpack.c.b16 %v96, %v95
    %v109 = vpack.c.b16 %v98, %v97
    %v110 = vpack.c.b16 %v100, %v99
    %v111 = vpack.c.b16 %v102, %v101
    %v112 = vpack.c.b16 %v104, %v103
    %v117 = vunpack.c.l.b16 %v69
    %v118 = vunpack.c.l.b16 %v70
    %v119 = vunpack.c.l.b16 %v71
    %v120 = vunpack.c.l.b16 %v72
    %v121 = vpack.c.b16 %v118, %v117
    %v122 = vpack.c.b16 %v120, %v119
    %vm125 = vcmask 261120
    %v127 = vsel %vm125, %v105, 0
    %v130 = vsel %vm125, %v106, 0
    %v133 = vsel %vm125, %v107, 0
    %v136 = vsel %vm125, %v108, 0
    %v139 = vsel %vm125, %v109, 0
    %v142 = vsel %vm125, %v110, 0
    %v145 = vsel %vm125, %v111, 0
    %v148 = vsel %vm125, %v112, 0
    %150 = vmatprep.subr.bf16.mxu0 0
    %151 = vmatpush1.bf16.msra.mxu0 %v121
    %152 = vmatprep.subr.bf16.mxu0 0
    %153 = vmatpush1.bf16.msra.mxu0 %v122
    %154 = vmatprep.subr.bf16.mxu0 0
    %155 = vmatpush1.bf16.msra.mxu0 0
    %156 = vmatprep.subr.bf16.mxu0 0
    %157 = vmatpush1.bf16.msra.mxu0 0
    %158 = vmatprep.subr.bf16.mxu0 0
    %159 = vmatpush1.bf16.msra.mxu0 0
    %160 = vmatprep.subr.bf16.mxu0 0
    %161 = vmatpush1.bf16.msra.mxu0 0
    %162 = vmatprep.subr.bf16.mxu0 0
    %163 = vmatpush1.bf16.msra.mxu0 0
    %164 = vmatprep.subr.bf16.mxu0 0
    %165 = vmatpush1.bf16.msra.mxu0 0
    %166 = vmatprep.subr.bf16.mxu0 0
    %167 = vmatpush1.bf16.msra.mxu0 0
    %168 = vmatprep.subr.bf16.mxu0 0
    %169 = vmatpush1.bf16.msra.mxu0 0
    %170 = vmatprep.subr.bf16.mxu0 0
    %171 = vmatpush1.bf16.msra.mxu0 0
    %172 = vmatprep.subr.bf16.mxu0 0
    %173 = vmatpush1.bf16.msra.mxu0 0
    %174 = vmatprep.subr.bf16.mxu0 0
    %175 = vmatpush1.bf16.msra.mxu0 0
    %176 = vmatprep.subr.bf16.mxu0 0
    %177 = vmatpush1.bf16.msra.mxu0 0
    %178 = vmatprep.subr.bf16.mxu0 0
    %179 = vmatpush1.bf16.msra.mxu0 0
    %180 = vmatprep.subr.bf16.mxu0 0
    %181 = vmatpush1.bf16.msra.mxu0 0
    %182 = vmatprep.mubr.bf16.mxu0 0
    %183 = vmatmul.mubr.bf16.gmra.mrb[0].mxu0 %v127
    %v184 = vpop.f32.mrb[0].mxu0
    %v185 = vadd.f32 0.0, %v184
    %v186 = vpop.f32.mrb[0].mxu0
    %v187 = vpop.f32.mrb[0].mxu0
    %v188 = vadd.f32 0.0, %v187
    %v189 = vpop.f32.mrb[0].mxu0
    %190 = vmatprep.mubr.bf16.mxu0 0
    %191 = vmatmul.mubr.bf16.gmra.mrb[0].mxu0 %v130
    %v192 = vpop.f32.mrb[0].mxu0
    %v193 = vadd.f32 0.0, %v192
    %v194 = vpop.f32.mrb[0].mxu0
    %v195 = vpop.f32.mrb[0].mxu0
    %v196 = vadd.f32 0.0, %v195
    %v197 = vpop.f32.mrb[0].mxu0
    %198 = vmatprep.mubr.bf16.mxu0 0
    %199 = vmatmul.mubr.bf16.gmra.mrb[0].mxu0 %v133
    %v200 = vpop.f32.mrb[0].mxu0
    %v201 = vadd.f32 0.0, %v200
    %v202 = vpop.f32.mrb[0].mxu0
    %v203 = vpop.f32.mrb[0].mxu0
    %v204 = vadd.f32 0.0, %v203
    %v205 = vpop.f32.mrb[0].mxu0
    %206 = vmatprep.mubr.bf16.mxu0 0
    %207 = vmatmul.mubr.bf16.gmra.mrb[0].mxu0 %v136
    %v208 = vpop.f32.mrb[0].mxu0
    %v209 = vadd.f32 0.0, %v208
    %v210 = vpop.f32.mrb[0].mxu0
    %v211 = vpop.f32.mrb[0].mxu0
    %v212 = vadd.f32 0.0, %v211
    %v213 = vpop.f32.mrb[0].mxu0
    %214 = vmatprep.mubr.bf16.mxu0 0
    %215 = vmatmul.mubr.bf16.gmra.mrb[0].mxu0 %v139
    %v216 = vpop.f32.mrb[0].mxu0
    %v217 = vadd.f32 0.0, %v216
    %v218 = vpop.f32.mrb[0].mxu0
    %v219 = vpop.f32.mrb[0].mxu0
    %v220 = vadd.f32 0.0, %v219
    %v221 = vpop.f32.mrb[0].mxu0
    %222 = vmatprep.mubr.bf16.mxu0 0
    %223 = vmatmul.mubr.bf16.gmra.mrb[0].mxu0 %v142
    %v224 = vpop.f32.mrb[0].mxu0
    %v225 = vadd.f32 0.0, %v224
    %v226 = vpop.f32.mrb[0].mxu0
    %v227 = vpop.f32.mrb[0].mxu0
    %v228 = vadd.f32 0.0, %v227
    %v229 = vpop.f32.mrb[0].mxu0
    %230 = vmatprep.mubr.bf16.mxu0 0
    %231 = vmatmul.mubr.bf16.gmra.mrb[0].mxu0 %v145
    %v232 = vpop.f32.mrb[0].mxu0
    %v233 = vadd.f32 0.0, %v232
    %v234 = vpop.f32.mrb[0].mxu0
    %v235 = vpop.f32.mrb[0].mxu0
    %v236 = vadd.f32 0.0, %v235
    %v237 = vpop.f32.mrb[0].mxu0
    %238 = vmatprep.mubr.bf16.mxu0 0
    %239 = vmatmul.mubr.bf16.gmra.mrb[0].mxu0 %v148
    %v240 = vpop.f32.mrb[0].mxu0
    %v241 = vadd.f32 0.0, %v240
    %v242 = vpop.f32.mrb[0].mxu0
    %v243 = vpop.f32.mrb[0].mxu0
    %v244 = vadd.f32 0.0, %v243
    %v245 = vpop.f32.mrb[0].mxu0
    %246 = vdwg.mxu0
    %v247 = vld [vmem:[%s5] sm:$0xf]
    %v248 = vpack.c.bf16 %v188, %v185
    %v249 = vpack.c.bf16 %v196, %v193
    %v250 = vpack.c.bf16 %v204, %v201
    %v251 = vpack.c.bf16 %v212, %v209
    %v252 = vpack.c.bf16 %v220, %v217
    %v253 = vpack.c.bf16 %v228, %v225
    %v254 = vpack.c.bf16 %v236, %v233
    %v255 = vpack.c.bf16 %v244, %v241
    %256 = vmatprep.subr.bf16.mxu0 0
    %257 = vmatpush1.bf16.msra.mxu0 %v248
    %258 = vmatprep.subr.bf16.mxu0 0
    %259 = vmatpush1.bf16.msra.mxu0 %v249
    %260 = vmatprep.subr.bf16.mxu0 0
    %261 = vmatpush1.bf16.msra.mxu0 %v250
    %262 = vmatprep.subr.bf16.mxu0 0
    %263 = vmatpush1.bf16.msra.mxu0 %v251
    %264 = vmatprep.subr.bf16.mxu0 0
    %265 = vmatpush1.bf16.msra.mxu0 %v252
    %266 = vmatprep.subr.bf16.mxu0 0
    %267 = vmatpush1.bf16.msra.mxu0 %v253
    %268 = vmatprep.subr.bf16.mxu0 0
    %269 = vmatpush1.bf16.msra.mxu0 %v254
    %270 = vmatprep.subr.bf16.mxu0 0
    %271 = vmatpush1.bf16.msra.mxu0 %v255
    %272 = vmatprep.subr.bf16.mxu0 0
    %273 = vmatpush1.bf16.msra.mxu0 0
    %274 = vmatprep.subr.bf16.mxu0 0
    %275 = vmatpush1.bf16.msra.mxu0 0
    %276 = vmatprep.subr.bf16.mxu0 0
    %277 = vmatpush1.bf16.msra.mxu0 0
    %278 = vmatprep.subr.bf16.mxu0 0
    %279 = vmatpush1.bf16.msra.mxu0 0
    %280 = vmatprep.subr.bf16.mxu0 0
    %281 = vmatpush1.bf16.msra.mxu0 0
    %282 = vmatprep.subr.bf16.mxu0 0
    %283 = vmatpush1.bf16.msra.mxu0 0
    %284 = vmatprep.subr.bf16.mxu0 0
    %285 = vmatpush1.bf16.msra.mxu0 0
    %286 = vmatprep.subr.bf16.mxu0 0
    %287 = vmatpush1.bf16.msra.mxu0 0
    %288 = vmatprep.mubr.bf16.mxu0 0
    %289 = vmatmul.mubr.bf16.gmra.mrb[0].mxu0 %v247
    %v290 = vpop.f32.mrb[0].mxu0
    %v291 = vadd.f32 0.0, %v290
    %v292 = vpop.f32.mrb[0].mxu0
    %v293 = vpop.f32.mrb[0].mxu0
    %v294 = vpop.f32.mrb[0].mxu0
    %295 = vdwg.mxu0
    %296 = vst [vmem:[#allocation2] sm:$0xff] %v291
    %v297 = vld [vmem:[#allocation3] sm:$0xf]
    %v298 = vld [vmem:[#allocation3 + $0x4] sm:$0xf]
    %v299 = vld [vmem:[#allocation3 + $0x8] sm:$0xf]
    %v300 = vld [vmem:[#allocation3 + $0xc] sm:$0xf]
    %v301 = vld [vmem:[#allocation3 + $0x10] sm:$0xf]
    %v302 = vld [vmem:[#allocation3 + $0x14] sm:$0xf]
    %v303 = vld [vmem:[#allocation3 + $0x18] sm:$0xf]
    %v304 = vld [vmem:[#allocation3 + $0x1c] sm:$0xf]
    %v305 = vld [vmem:[#allocation3 + $0x20] sm:$0xf]
    %v306 = vld [vmem:[#allocation3 + $0x24] sm:$0xf]
    %v307 = vld [vmem:[#allocation3 + $0x28] sm:$0xf]
    %v308 = vld [vmem:[#allocation3 + $0x2c] sm:$0xf]
    %v309 = vld [vmem:[#allocation3 + $0x30] sm:$0xf]
    %v310 = vld [vmem:[#allocation3 + $0x34] sm:$0xf]
    %v311 = vld [vmem:[#allocation3 + $0x38] sm:$0xf]
    %v312 = vld [vmem:[#allocation3 + $0x3c] sm:$0xf]
    %v329 = vunpack.c.l.b16 %v297
    %v330 = vunpack.c.l.b16 %v298
    %v331 = vunpack.c.l.b16 %v299
    %v332 = vunpack.c.l.b16 %v300
    %v333 = vunpack.c.l.b16 %v301
    %v334 = vunpack.c.l.b16 %v302
    %v335 = vunpack.c.l.b16 %v303
    %v336 = vunpack.c.l.b16 %v304
    %v337 = vunpack.c.l.b16 %v305
    %v338 = vunpack.c.l.b16 %v306
    %v339 = vunpack.c.l.b16 %v307
    %v340 = vunpack.c.l.b16 %v308
    %v341 = vunpack.c.l.b16 %v309
    %v342 = vunpack.c.l.b16 %v310
    %v343 = vunpack.c.l.b16 %v311
    %v344 = vunpack.c.l.b16 %v312
    %v345 = vpack.c.b16 %v330, %v329
    %v346 = vpack.c.b16 %v332, %v331
    %v347 = vpack.c.b16 %v334, %v333
    %v348 = vpack.c.b16 %v336, %v335
    %v349 = vpack.c.b16 %v338, %v337
    %v350 = vpack.c.b16 %v340, %v339
    %v351 = vpack.c.b16 %v342, %v341
    %v352 = vpack.c.b16 %v344, %v343
    %361 = vmatprep.subr.bf16.mxu0 0
    %362 = vmatpush1.bf16.msra.mxu0 %v345
    %363 = vmatprep.subr.bf16.mxu0 0
    %364 = vmatpush1.bf16.msra.mxu0 %v346
    %365 = vmatprep.subr.bf16.mxu0 0
    %366 = vmatpush1.bf16.msra.mxu0 %v347
    %367 = vmatprep.subr.bf16.mxu0 0
    %368 = vmatpush1.bf16.msra.mxu0 %v348
    %369 = vmatprep.subr.bf16.mxu0 0
    %370 = vmatpush1.bf16.msra.mxu0 %v349
    %371 = vmatprep.subr.bf16.mxu0 0
    %372 = vmatpush1.bf16.msra.mxu0 %v350
    %373 = vmatprep.subr.bf16.mxu0 0
    %374 = vmatpush1.bf16.msra.mxu0 %v351
    %375 = vmatprep.subr.bf16.mxu0 0
    %376 = vmatpush1.bf16.msra.mxu0 %v352
    %377 = vmatprep.subr.bf16.mxu0 0
    %378 = vmatpush1.bf16.msra.mxu0 0
    %379 = vmatprep.subr.bf16.mxu0 0
    %380 = vmatpush1.bf16.msra.mxu0 0
    %381 = vmatprep.subr.bf16.mxu0 0
    %382 = vmatpush1.bf16.msra.mxu0 0
    %383 = vmatprep.subr.bf16.mxu0 0
    %384 = vmatpush1.bf16.msra.mxu0 0
    %385 = vmatprep.subr.bf16.mxu0 0
    %386 = vmatpush1.bf16.msra.mxu0 0
    %387 = vmatprep.subr.bf16.mxu0 0
    %388 = vmatpush1.bf16.msra.mxu0 0
    %389 = vmatprep.subr.bf16.mxu0 0
    %390 = vmatpush1.bf16.msra.mxu0 0
    %391 = vmatprep.subr.bf16.mxu0 0
    %392 = vmatpush1.bf16.msra.mxu0 0
    %393 = vmatprep.mubr.bf16.mxu0 0
    %394 = vmatmul.mubr.bf16.gmra.mrb[0].mxu0 %v248
    %v395 = vpop.f32.mrb[0].mxu0
    %v396 = vadd.f32 0.0, %v395
    %v397 = vpop.f32.mrb[0].mxu0
    %v398 = vpop.f32.mrb[0].mxu0
    %v399 = vadd.f32 0.0, %v398
    %v400 = vpop.f32.mrb[0].mxu0
    %401 = vmatprep.mubr.bf16.mxu0 0
    %402 = vmatmul.mubr.bf16.gmra.mrb[0].mxu0 %v249
    %v403 = vpop.f32.mrb[0].mxu0
    %v404 = vadd.f32 0.0, %v403
    %v405 = vpop.f32.mrb[0].mxu0
    %v406 = vpop.f32.mrb[0].mxu0
    %v407 = vadd.f32 0.0, %v406
    %v408 = vpop.f32.mrb[0].mxu0
    %409 = vmatprep.mubr.bf16.mxu0 0
    %410 = vmatmul.mubr.bf16.gmra.mrb[0].mxu0 %v250
    %v411 = vpop.f32.mrb[0].mxu0
    %v412 = vadd.f32 0.0, %v411
    %v413 = vpop.f32.mrb[0].mxu0
    %v414 = vpop.f32.mrb[0].mxu0
    %v415 = vadd.f32 0.0, %v414
    %v416 = vpop.f32.mrb[0].mxu0
    %417 = vmatprep.mubr.bf16.mxu0 0
    %418 = vmatmul.mubr.bf16.gmra.mrb[0].mxu0 %v251
    %v419 = vpop.f32.mrb[0].mxu0
    %v420 = vadd.f32 0.0, %v419
    %v421 = vpop.f32.mrb[0].mxu0
    %v422 = vpop.f32.mrb[0].mxu0
    %v423 = vadd.f32 0.0, %v422
    %v424 = vpop.f32.mrb[0].mxu0
    %425 = vmatprep.mubr.bf16.mxu0 0
    %426 = vmatmul.mubr.bf16.gmra.mrb[0].mxu0 %v252
    %v427 = vpop.f32.mrb[0].mxu0
    %v428 = vadd.f32 0.0, %v427
    %v429 = vpop.f32.mrb[0].mxu0
    %v430 = vpop.f32.mrb[0].mxu0
    %v431 = vadd.f32 0.0, %v430
    %v432 = vpop.f32.mrb[0].mxu0
    %433 = vmatprep.mubr.bf16.mxu0 0
    %434 = vmatmul.mubr.bf16.gmra.mrb[0].mxu0 %v253
    %v435 = vpop.f32.mrb[0].mxu0
    %v436 = vadd.f32 0.0, %v435
    %v437 = vpop.f32.mrb[0].mxu0
    %v438 = vpop.f32.mrb[0].mxu0
    %v439 = vadd.f32 0.0, %v438
    %v440 = vpop.f32.mrb[0].mxu0
    %441 = vmatprep.mubr.bf16.mxu0 0
    %442 = vmatmul.mubr.bf16.gmra.mrb[0].mxu0 %v254
    %v443 = vpop.f32.mrb[0].mxu0
    %v444 = vadd.f32 0.0, %v443
    %v445 = vpop.f32.mrb[0].mxu0
    %v446 = vpop.f32.mrb[0].mxu0
    %v447 = vadd.f32 0.0, %v446
    %v448 = vpop.f32.mrb[0].mxu0
    %449 = vmatprep.mubr.bf16.mxu0 0
    %450 = vmatmul.mubr.bf16.gmra.mrb[0].mxu0 %v255
    %v451 = vpop.f32.mrb[0].mxu0
    %v452 = vadd.f32 0.0, %v451
    %v453 = vpop.f32.mrb[0].mxu0
    %v454 = vpop.f32.mrb[0].mxu0
    %v455 = vadd.f32 0.0, %v454
    %v456 = vpop.f32.mrb[0].mxu0
    %457 = vdwg.mxu0
    %v458 = vld [vmem:[%s2] sm:$0xf]
    %v459 = vld [vmem:[%s2 + $0x4] sm:$0xf]
    %v460 = vld [vmem:[%s2 + $0x8] sm:$0xf]
    %v461 = vld [vmem:[%s2 + $0xc] sm:$0xf]
    %v462 = vld [vmem:[%s2 + $0x10] sm:$0xf]
    %v463 = vld [vmem:[%s2 + $0x14] sm:$0xf]
    %v464 = vld [vmem:[%s2 + $0x18] sm:$0xf]
    %v465 = vld [vmem:[%s2 + $0x1c] sm:$0xf]
    %v466 = vld [vmem:[%s2 + $0x20] sm:$0xf]
    %v467 = vld [vmem:[%s2 + $0x24] sm:$0xf]
    %v468 = vld [vmem:[%s2 + $0x28] sm:$0xf]
    %v469 = vld [vmem:[%s2 + $0x2c] sm:$0xf]
    %v470 = vld [vmem:[%s2 + $0x30] sm:$0xf]
    %v471 = vld [vmem:[%s2 + $0x34] sm:$0xf]
    %v472 = vld [vmem:[%s2 + $0x38] sm:$0xf]
    %v473 = vld [vmem:[%s2 + $0x3c] sm:$0xf]
    %v474 = vpack.c.bf16 %v399, %v396
    %v475 = vpack.c.bf16 %v407, %v404
    %v476 = vpack.c.bf16 %v415, %v412
    %v477 = vpack.c.bf16 %v423, %v420
    %v478 = vpack.c.bf16 %v431, %v428
    %v479 = vpack.c.bf16 %v439, %v436
    %v480 = vpack.c.bf16 %v447, %v444
    %v481 = vpack.c.bf16 %v455, %v452
    %v498 = vunpack.c.l.b16 %v458
    %v499 = vunpack.c.l.b16 %v459
    %v500 = vunpack.c.l.b16 %v460
    %v501 = vunpack.c.l.b16 %v461
    %v502 = vunpack.c.l.b16 %v462
    %v503 = vunpack.c.l.b16 %v463
    %v504 = vunpack.c.l.b16 %v464
    %v505 = vunpack.c.l.b16 %v465
    %v506 = vunpack.c.l.b16 %v466
    %v507 = vunpack.c.l.b16 %v467
    %v508 = vunpack.c.l.b16 %v468
    %v509 = vunpack.c.l.b16 %v469
    %v510 = vunpack.c.l.b16 %v470
    %v511 = vunpack.c.l.b16 %v471
    %v512 = vunpack.c.l.b16 %v472
    %v513 = vunpack.c.l.b16 %v473
    %v514 = vpack.c.b16 %v499, %v498
    %v515 = vpack.c.b16 %v501, %v500
    %v516 = vpack.c.b16 %v503, %v502
    %v517 = vpack.c.b16 %v505, %v504
    %v518 = vpack.c.b16 %v507, %v506
    %v519 = vpack.c.b16 %v509, %v508
    %v520 = vpack.c.b16 %v511, %v510
    %v521 = vpack.c.b16 %v513, %v512
    %530 = vmatprep.subr.bf16.mxu0 0
    %531 = vmatpush1.bf16.msra.mxu0 %v474
    %532 = vmatprep.subr.bf16.mxu0 0
    %533 = vmatpush1.bf16.msra.mxu0 %v475
    %534 = vmatprep.subr.bf16.mxu0 0
    %535 = vmatpush1.bf16.msra.mxu0 %v476
    %536 = vmatprep.subr.bf16.mxu0 0
    %537 = vmatpush1.bf16.msra.mxu0 %v477
    %538 = vmatprep.subr.bf16.mxu0 0
    %539 = vmatpush1.bf16.msra.mxu0 %v478
    %540 = vmatprep.subr.bf16.mxu0 0
    %541 = vmatpush1.bf16.msra.mxu0 %v479
    %542 = vmatprep.subr.bf16.mxu0 0
    %543 = vmatpush1.bf16.msra.mxu0 %v480
    %544 = vmatprep.subr.bf16.mxu0 0
    %545 = vmatpush1.bf16.msra.mxu0 %v481
    %546 = vmatprep.subr.bf16.mxu0 0
    %547 = vmatpush1.bf16.msra.mxu0 0
    %548 = vmatprep.subr.bf16.mxu0 0
    %549 = vmatpush1.bf16.msra.mxu0 0
    %550 = vmatprep.subr.bf16.mxu0 0
    %551 = vmatpush1.bf16.msra.mxu0 0
    %552 = vmatprep.subr.bf16.mxu0 0
    %553 = vmatpush1.bf16.msra.mxu0 0
    %554 = vmatprep.subr.bf16.mxu0 0
    %555 = vmatpush1.bf16.msra.mxu0 0
    %556 = vmatprep.subr.bf16.mxu0 0
    %557 = vmatpush1.bf16.msra.mxu0 0
    %558 = vmatprep.subr.bf16.mxu0 0
    %559 = vmatpush1.bf16.msra.mxu0 0
    %560 = vmatprep.subr.bf16.mxu0 0
    %561 = vmatpush1.bf16.msra.mxu0 0
    %562 = vmatprep.mubr.bf16.mxu0 0
    %563 = vmatmul.mubr.bf16.gmra.mrb[0].mxu0 %v514
    %v564 = vpop.f32.mrb[0].mxu0
    %v565 = vadd.f32 %v185, %v564
    %v566 = vpop.f32.mrb[0].mxu0
    %v567 = vpop.f32.mrb[0].mxu0
    %v568 = vadd.f32 %v188, %v567
    %v569 = vpop.f32.mrb[0].mxu0
    %570 = vmatprep.mubr.bf16.mxu0 0
    %571 = vmatmul.mubr.bf16.gmra.mrb[0].mxu0 %v515
    %v572 = vpop.f32.mrb[0].mxu0
    %v573 = vadd.f32 %v193, %v572
    %v574 = vpop.f32.mrb[0].mxu0
    %v575 = vpop.f32.mrb[0].mxu0
    %v576 = vadd.f32 %v196, %v575
    %v577 = vpop.f32.mrb[0].mxu0
    %578 = vmatprep.mubr.bf16.mxu0 0
    %579 = vmatmul.mubr.bf16.gmra.mrb[0].mxu0 %v516
    %v580 = vpop.f32.mrb[0].mxu0
    %v581 = vadd.f32 %v201, %v580
    %v582 = vpop.f32.mrb[0].mxu0
    %v583 = vpop.f32.mrb[0].mxu0
    %v584 = vadd.f32 %v204, %v583
    %v585 = vpop.f32.mrb[0].mxu0
    %586 = vmatprep.mubr.bf16.mxu0 0
    %587 = vmatmul.mubr.bf16.gmra.mrb[0].mxu0 %v517
    %v588 = vpop.f32.mrb[0].mxu0
    %v589 = vadd.f32 %v209, %v588
    %v590 = vpop.f32.mrb[0].mxu0
    %v591 = vpop.f32.mrb[0].mxu0
    %v592 = vadd.f32 %v212, %v591
    %v593 = vpop.f32.mrb[0].mxu0
    %594 = vmatprep.mubr.bf16.mxu0 0
    %595 = vmatmul.mubr.bf16.gmra.mrb[0].mxu0 %v518
    %v596 = vpop.f32.mrb[0].mxu0
    %v597 = vadd.f32 %v217, %v596
    %v598 = vpop.f32.mrb[0].mxu0
    %v599 = vpop.f32.mrb[0].mxu0
    %v600 = vadd.f32 %v220, %v599
    %v601 = vpop.f32.mrb[0].mxu0
    %602 = vmatprep.mubr.bf16.mxu0 0
    %603 = vmatmul.mubr.bf16.gmra.mrb[0].mxu0 %v519
    %v604 = vpop.f32.mrb[0].mxu0
    %v605 = vadd.f32 %v225, %v604
    %v606 = vpop.f32.mrb[0].mxu0
    %v607 = vpop.f32.mrb[0].mxu0
    %v608 = vadd.f32 %v228, %v607
    %v609 = vpop.f32.mrb[0].mxu0
    %610 = vmatprep.mubr.bf16.mxu0 0
    %611 = vmatmul.mubr.bf16.gmra.mrb[0].mxu0 %v520
    %v612 = vpop.f32.mrb[0].mxu0
    %v613 = vadd.f32 %v233, %v612
    %v614 = vpop.f32.mrb[0].mxu0
    %v615 = vpop.f32.mrb[0].mxu0
    %v616 = vadd.f32 %v236, %v615
    %v617 = vpop.f32.mrb[0].mxu0
    %618 = vmatprep.mubr.bf16.mxu0 0
    %619 = vmatmul.mubr.bf16.gmra.mrb[0].mxu0 %v521
    %v620 = vpop.f32.mrb[0].mxu0
    %v621 = vadd.f32 %v241, %v620
    %v622 = vpop.f32.mrb[0].mxu0
    %v623 = vpop.f32.mrb[0].mxu0
    %v624 = vadd.f32 %v244, %v623
    %v625 = vpop.f32.mrb[0].mxu0
    %626 = vdwg.mxu0
    %v627 = vmax.f32 %v565, 0.0
    %v628 = vmax.f32 %v568, 0.0
    %v629 = vmax.f32 %v573, 0.0
    %v630 = vmax.f32 %v576, 0.0
    %v631 = vmax.f32 %v581, 0.0
    %v632 = vmax.f32 %v584, 0.0
    %v633 = vmax.f32 %v589, 0.0
    %v634 = vmax.f32 %v592, 0.0
    %v635 = vmax.f32 %v597, 0.0
    %v636 = vmax.f32 %v600, 0.0
    %v637 = vmax.f32 %v605, 0.0
    %v638 = vmax.f32 %v608, 0.0
    %v639 = vmax.f32 %v613, 0.0
    %v640 = vmax.f32 %v616, 0.0
    %v641 = vmax.f32 %v621, 0.0
    %v642 = vmax.f32 %v624, 0.0
    %v643 = vld [vmem:[%s5] sm:$0xf]
    %v644 = vpack.c.bf16 %v628, %v627
    %v645 = vpack.c.bf16 %v630, %v629
    %v646 = vpack.c.bf16 %v632, %v631
    %v647 = vpack.c.bf16 %v634, %v633
    %v648 = vpack.c.bf16 %v636, %v635
    %v649 = vpack.c.bf16 %v638, %v637
    %v650 = vpack.c.bf16 %v640, %v639
    %v651 = vpack.c.bf16 %v642, %v641
    %652 = vmatprep.subr.bf16.mxu0 0
    %653 = vmatpush1.bf16.msra.mxu0 %v644
    %654 = vmatprep.subr.bf16.mxu0 0
    %655 = vmatpush1.bf16.msra.mxu0 %v645
    %656 = vmatprep.subr.bf16.mxu0 0
    %657 = vmatpush1.bf16.msra.mxu0 %v646
    %658 = vmatprep.subr.bf16.mxu0 0
    %659 = vmatpush1.bf16.msra.mxu0 %v647
    %660 = vmatprep.subr.bf16.mxu0 0
    %661 = vmatpush1.bf16.msra.mxu0 %v648
    %662 = vmatprep.subr.bf16.mxu0 0
    %663 = vmatpush1.bf16.msra.mxu0 %v649
    %664 = vmatprep.subr.bf16.mxu0 0
    %665 = vmatpush1.bf16.msra.mxu0 %v650
    %666 = vmatprep.subr.bf16.mxu0 0
    %667 = vmatpush1.bf16.msra.mxu0 %v651
    %668 = vmatprep.subr.bf16.mxu0 0
    %669 = vmatpush1.bf16.msra.mxu0 0
    %670 = vmatprep.subr.bf16.mxu0 0
    %671 = vmatpush1.bf16.msra.mxu0 0
    %672 = vmatprep.subr.bf16.mxu0 0
    %673 = vmatpush1.bf16.msra.mxu0 0
    %674 = vmatprep.subr.bf16.mxu0 0
    %675 = vmatpush1.bf16.msra.mxu0 0
    %676 = vmatprep.subr.bf16.mxu0 0
    %677 = vmatpush1.bf16.msra.mxu0 0
    %678 = vmatprep.subr.bf16.mxu0 0
    %679 = vmatpush1.bf16.msra.mxu0 0
    %680 = vmatprep.subr.bf16.mxu0 0
    %681 = vmatpush1.bf16.msra.mxu0 0
    %682 = vmatprep.subr.bf16.mxu0 0
    %683 = vmatpush1.bf16.msra.mxu0 0
    %684 = vmatprep.mubr.bf16.mxu0 0
    %685 = vmatmul.mubr.bf16.gmra.mrb[0].mxu0 %v643
    %v686 = vpop.f32.mrb[0].mxu0
    %v687 = vadd.f32 0.0, %v686
    %v688 = vpop.f32.mrb[0].mxu0
    %v689 = vpop.f32.mrb[0].mxu0
    %v690 = vpop.f32.mrb[0].mxu0
    %691 = vdwg.mxu0
    %692 = vst [vmem:[#allocation2 + $0x8] sm:$0xff] %v687
    %s693 = scalar_lea.vmem [#allocation3], 64
    %v694 = vld [vmem:[%s693] sm:$0xf]
    %v695 = vld [vmem:[%s693 + $0x4] sm:$0xf]
    %v696 = vld [vmem:[%s693 + $0x8] sm:$0xf]
    %v697 = vld [vmem:[%s693 + $0xc] sm:$0xf]
    %v698 = vld [vmem:[%s693 + $0x10] sm:$0xf]
    %v699 = vld [vmem:[%s693 + $0x14] sm:$0xf]
    %v700 = vld [vmem:[%s693 + $0x18] sm:$0xf]
    %v701 = vld [vmem:[%s693 + $0x1c] sm:$0xf]
    %v702 = vld [vmem:[%s693 + $0x20] sm:$0xf]
    %v703 = vld [vmem:[%s693 + $0x24] sm:$0xf]
    %v704 = vld [vmem:[%s693 + $0x28] sm:$0xf]
    %v705 = vld [vmem:[%s693 + $0x2c] sm:$0xf]
    %v706 = vld [vmem:[%s693 + $0x30] sm:$0xf]
    %v707 = vld [vmem:[%s693 + $0x34] sm:$0xf]
    %v708 = vld [vmem:[%s693 + $0x38] sm:$0xf]
    %v709 = vld [vmem:[%s693 + $0x3c] sm:$0xf]
    %v726 = vunpack.c.l.b16 %v694
    %v727 = vunpack.c.l.b16 %v695
    %v728 = vunpack.c.l.b16 %v696
    %v729 = vunpack.c.l.b16 %v697
    %v730 = vunpack.c.l.b16 %v698
    %v731 = vunpack.c.l.b16 %v699
    %v732 = vunpack.c.l.b16 %v700
    %v733 = vunpack.c.l.b16 %v701
    %v734 = vunpack.c.l.b16 %v702
    %v735 = vunpack.c.l.b16 %v703
    %v736 = vunpack.c.l.b16 %v704
    %v737 = vunpack.c.l.b16 %v705
    %v738 = vunpack.c.l.b16 %v706
    %v739 = vunpack.c.l.b16 %v707
    %v740 = vunpack.c.l.b16 %v708
    %v741 = vunpack.c.l.b16 %v709
    %v742 = vpack.c.b16 %v727, %v726
    %v743 = vpack.c.b16 %v729, %v728
    %v744 = vpack.c.b16 %v731, %v730
    %v745 = vpack.c.b16 %v733, %v732
    %v746 = vpack.c.b16 %v735, %v734
    %v747 = vpack.c.b16 %v737, %v736
    %v748 = vpack.c.b16 %v739, %v738
    %v749 = vpack.c.b16 %v741, %v740
    %758 = vmatprep.subr.bf16.mxu0 0
    %759 = vmatpush1.bf16.msra.mxu0 %v742
    %760 = vmatprep.subr.bf16.mxu0 0
    %761 = vmatpush1.bf16.msra.mxu0 %v743
    %762 = vmatprep.subr.bf16.mxu0 0
    %763 = vmatpush1.bf16.msra.mxu0 %v744
    %764 = vmatprep.subr.bf16.mxu0 0
    %765 = vmatpush1.bf16.msra.mxu0 %v745
    %766 = vmatprep.subr.bf16.mxu0 0
    %767 = vmatpush1.bf16.msra.mxu0 %v746
    %768 = vmatprep.subr.bf16.mxu0 0
    %769 = vmatpush1.bf16.msra.mxu0 %v747
    %770 = vmatprep.subr.bf16.mxu0 0
    %771 = vmatpush1.bf16.msra.mxu0 %v748
    %772 = vmatprep.subr.bf16.mxu0 0
    %773 = vmatpush1.bf16.msra.mxu0 %v749
    %774 = vmatprep.subr.bf16.mxu0 0
    %775 = vmatpush1.bf16.msra.mxu0 0
    %776 = vmatprep.subr.bf16.mxu0 0
    %777 = vmatpush1.bf16.msra.mxu0 0
    %778 = vmatprep.subr.bf16.mxu0 0
    %779 = vmatpush1.bf16.msra.mxu0 0
    %780 = vmatprep.subr.bf16.mxu0 0
    %781 = vmatpush1.bf16.msra.mxu0 0
    %782 = vmatprep.subr.bf16.mxu0 0
    %783 = vmatpush1.bf16.msra.mxu0 0
    %784 = vmatprep.subr.bf16.mxu0 0
    %785 = vmatpush1.bf16.msra.mxu0 0
    %786 = vmatprep.subr.bf16.mxu0 0
    %787 = vmatpush1.bf16.msra.mxu0 0
    %788 = vmatprep.subr.bf16.mxu0 0
    %789 = vmatpush1.bf16.msra.mxu0 0
    %790 = vmatprep.mubr.bf16.mxu0 0
    %791 = vmatmul.mubr.bf16.gmra.mrb[0].mxu0 %v644
    %v792 = vpop.f32.mrb[0].mxu0
    %v793 = vadd.f32 0.0, %v792
    %v794 = vpop.f32.mrb[0].mxu0
    %v795 = vpop.f32.mrb[0].mxu0
    %v796 = vadd.f32 0.0, %v795
    %v797 = vpop.f32.mrb[0].mxu0
    %798 = vmatprep.mubr.bf16.mxu0 0
    %799 = vmatmul.mubr.bf16.gmra.mrb[0].mxu0 %v645
    %v800 = vpop.f32.mrb[0].mxu0
    %v801 = vadd.f32 0.0, %v800
    %v802 = vpop.f32.mrb[0].mxu0
    %v803 = vpop.f32.mrb[0].mxu0
    %v804 = vadd.f32 0.0, %v803
    %v805 = vpop.f32.mrb[0].mxu0
    %806 = vmatprep.mubr.bf16.mxu0 0
    %807 = vmatmul.mubr.bf16.gmra.mrb[0].mxu0 %v646
    %v808 = vpop.f32.mrb[0].mxu0
    %v809 = vadd.f32 0.0, %v808
    %v810 = vpop.f32.mrb[0].mxu0
    %v811 = vpop.f32.mrb[0].mxu0
    %v812 = vadd.f32 0.0, %v811
    %v813 = vpop.f32.mrb[0].mxu0
    %814 = vmatprep.mubr.bf16.mxu0 0
    %815 = vmatmul.mubr.bf16.gmra.mrb[0].mxu0 %v647
    %v816 = vpop.f32.mrb[0].mxu0
    %v817 = vadd.f32 0.0, %v816
    %v818 = vpop.f32.mrb[0].mxu0
    %v819 = vpop.f32.mrb[0].mxu0
    %v820 = vadd.f32 0.0, %v819
    %v821 = vpop.f32.mrb[0].mxu0
    %822 = vmatprep.mubr.bf16.mxu0 0
    %823 = vmatmul.mubr.bf16.gmra.mrb[0].mxu0 %v648
    %v824 = vpop.f32.mrb[0].mxu0
    %v825 = vadd.f32 0.0, %v824
    %v826 = vpop.f32.mrb[0].mxu0
    %v827 = vpop.f32.mrb[0].mxu0
    %v828 = vadd.f32 0.0, %v827
    %v829 = vpop.f32.mrb[0].mxu0
    %830 = vmatprep.mubr.bf16.mxu0 0
    %831 = vmatmul.mubr.bf16.gmra.mrb[0].mxu0 %v649
    %v832 = vpop.f32.mrb[0].mxu0
    %v833 = vadd.f32 0.0, %v832
    %v834 = vpop.f32.mrb[0].mxu0
    %v835 = vpop.f32.mrb[0].mxu0
    %v836 = vadd.f32 0.0, %v835
    %v837 = vpop.f32.mrb[0].mxu0
    %838 = vmatprep.mubr.bf16.mxu0 0
    %839 = vmatmul.mubr.bf16.gmra.mrb[0].mxu0 %v650
    %v840 = vpop.f32.mrb[0].mxu0
    %v841 = vadd.f32 0.0, %v840
    %v842 = vpop.f32.mrb[0].mxu0
    %v843 = vpop.f32.mrb[0].mxu0
    %v844 = vadd.f32 0.0, %v843
    %v845 = vpop.f32.mrb[0].mxu0
    %846 = vmatprep.mubr.bf16.mxu0 0
    %847 = vmatmul.mubr.bf16.gmra.mrb[0].mxu0 %v651
    %v848 = vpop.f32.mrb[0].mxu0
    %v849 = vadd.f32 0.0, %v848
    %v850 = vpop.f32.mrb[0].mxu0
    %v851 = vpop.f32.mrb[0].mxu0
    %v852 = vadd.f32 0.0, %v851
    %v853 = vpop.f32.mrb[0].mxu0
    %854 = vdwg.mxu0
    %v855 = vld [vmem:[%s2] sm:$0xf]
    %v856 = vld [vmem:[%s2 + $0x4] sm:$0xf]
    %v857 = vld [vmem:[%s2 + $0x8] sm:$0xf]
    %v858 = vld [vmem:[%s2 + $0xc] sm:$0xf]
    %v859 = vld [vmem:[%s2 + $0x10] sm:$0xf]
    %v860 = vld [vmem:[%s2 + $0x14] sm:$0xf]
    %v861 = vld [vmem:[%s2 + $0x18] sm:$0xf]
    %v862 = vld [vmem:[%s2 + $0x1c] sm:$0xf]
    %v863 = vld [vmem:[%s2 + $0x20] sm:$0xf]
    %v864 = vld [vmem:[%s2 + $0x24] sm:$0xf]
    %v865 = vld [vmem:[%s2 + $0x28] sm:$0xf]
    %v866 = vld [vmem:[%s2 + $0x2c] sm:$0xf]
    %v867 = vld [vmem:[%s2 + $0x30] sm:$0xf]
    %v868 = vld [vmem:[%s2 + $0x34] sm:$0xf]
    %v869 = vld [vmem:[%s2 + $0x38] sm:$0xf]
    %v870 = vld [vmem:[%s2 + $0x3c] sm:$0xf]
    %v871 = vpack.c.bf16 %v796, %v793
    %v872 = vpack.c.bf16 %v804, %v801
    %v873 = vpack.c.bf16 %v812, %v809
    %v874 = vpack.c.bf16 %v820, %v817
    %v875 = vpack.c.bf16 %v828, %v825
    %v876 = vpack.c.bf16 %v836, %v833
    %v877 = vpack.c.bf16 %v844, %v841
    %v878 = vpack.c.bf16 %v852, %v849
    %v895 = vunpack.c.l.b16 %v855
    %v896 = vunpack.c.l.b16 %v856
    %v897 = vunpack.c.l.b16 %v857
    %v898 = vunpack.c.l.b16 %v858
    %v899 = vunpack.c.l.b16 %v859
    %v900 = vunpack.c.l.b16 %v860
    %v901 = vunpack.c.l.b16 %v861
    %v902 = vunpack.c.l.b16 %v862
    %v903 = vunpack.c.l.b16 %v863
    %v904 = vunpack.c.l.b16 %v864
    %v905 = vunpack.c.l.b16 %v865
    %v906 = vunpack.c.l.b16 %v866
    %v907 = vunpack.c.l.b16 %v867
    %v908 = vunpack.c.l.b16 %v868
    %v909 = vunpack.c.l.b16 %v869
    %v910 = vunpack.c.l.b16 %v870
    %v911 = vpack.c.b16 %v896, %v895
    %v912 = vpack.c.b16 %v898, %v897
    %v913 = vpack.c.b16 %v900, %v899
    %v914 = vpack.c.b16 %v902, %v901
    %v915 = vpack.c.b16 %v904, %v903
    %v916 = vpack.c.b16 %v906, %v905
    %v917 = vpack.c.b16 %v908, %v907
    %v918 = vpack.c.b16 %v910, %v909
    %927 = vmatprep.subr.bf16.mxu0 0
    %928 = vmatpush1.bf16.msra.mxu0 %v871
    %929 = vmatprep.subr.bf16.mxu0 0
    %930 = vmatpush1.bf16.msra.mxu0 %v872
    %931 = vmatprep.subr.bf16.mxu0 0
    %932 = vmatpush1.bf16.msra.mxu0 %v873
    %933 = vmatprep.subr.bf16.mxu0 0
    %934 = vmatpush1.bf16.msra.mxu0 %v874
    %935 = vmatprep.subr.bf16.mxu0 0
    %936 = vmatpush1.bf16.msra.mxu0 %v875
    %937 = vmatprep.subr.bf16.mxu0 0
    %938 = vmatpush1.bf16.msra.mxu0 %v876
    %939 = vmatprep.subr.bf16.mxu0 0
    %940 = vmatpush1.bf16.msra.mxu0 %v877
    %941 = vmatprep.subr.bf16.mxu0 0
    %942 = vmatpush1.bf16.msra.mxu0 %v878
    %943 = vmatprep.subr.bf16.mxu0 0
    %944 = vmatpush1.bf16.msra.mxu0 0
    %945 = vmatprep.subr.bf16.mxu0 0
    %946 = vmatpush1.bf16.msra.mxu0 0
    %947 = vmatprep.subr.bf16.mxu0 0
    %948 = vmatpush1.bf16.msra.mxu0 0
    %949 = vmatprep.subr.bf16.mxu0 0
    %950 = vmatpush1.bf16.msra.mxu0 0
    %951 = vmatprep.subr.bf16.mxu0 0
    %952 = vmatpush1.bf16.msra.mxu0 0
    %953 = vmatprep.subr.bf16.mxu0 0
    %954 = vmatpush1.bf16.msra.mxu0 0
    %955 = vmatprep.subr.bf16.mxu0 0
    %956 = vmatpush1.bf16.msra.mxu0 0
    %957 = vmatprep.subr.bf16.mxu0 0
    %958 = vmatpush1.bf16.msra.mxu0 0
    %959 = vmatprep.mubr.bf16.mxu0 0
    %960 = vmatmul.mubr.bf16.gmra.mrb[0].mxu0 %v911
    %v961 = vpop.f32.mrb[0].mxu0
    %v962 = vadd.f32 %v627, %v961
    %v963 = vpop.f32.mrb[0].mxu0
    %v964 = vpop.f32.mrb[0].mxu0
    %v965 = vadd.f32 %v628, %v964
    %v966 = vpop.f32.mrb[0].mxu0
    %967 = vmatprep.mubr.bf16.mxu0 0
    %968 = vmatmul.mubr.bf16.gmra.mrb[0].mxu0 %v912
    %v969 = vpop.f32.mrb[0].mxu0
    %v970 = vadd.f32 %v629, %v969
    %v971 = vpop.f32.mrb[0].mxu0
    %v972 = vpop.f32.mrb[0].mxu0
    %v973 = vadd.f32 %v630, %v972
    %v974 = vpop.f32.mrb[0].mxu0
    %975 = vmatprep.mubr.bf16.mxu0 0
    %976 = vmatmul.mubr.bf16.gmra.mrb[0].mxu0 %v913
    %v977 = vpop.f32.mrb[0].mxu0
    %v978 = vadd.f32 %v631, %v977
    %v979 = vpop.f32.mrb[0].mxu0
    %v980 = vpop.f32.mrb[0].mxu0
    %v981 = vadd.f32 %v632, %v980
    %v982 = vpop.f32.mrb[0].mxu0
    %983 = vmatprep.mubr.bf16.mxu0 0
    %984 = vmatmul.mubr.bf16.gmra.mrb[0].mxu0 %v914
    %v985 = vpop.f32.mrb[0].mxu0
    %v986 = vadd.f32 %v633, %v985
    %v987 = vpop.f32.mrb[0].mxu0
    %v988 = vpop.f32.mrb[0].mxu0
    %v989 = vadd.f32 %v634, %v988
    %v990 = vpop.f32.mrb[0].mxu0
    %991 = vmatprep.mubr.bf16.mxu0 0
    %992 = vmatmul.mubr.bf16.gmra.mrb[0].mxu0 %v915
    %v993 = vpop.f32.mrb[0].mxu0
    %v994 = vadd.f32 %v635, %v993
    %v995 = vpop.f32.mrb[0].mxu0
    %v996 = vpop.f32.mrb[0].mxu0
    %v997 = vadd.f32 %v636, %v996
    %v998 = vpop.f32.mrb[0].mxu0
    %999 = vmatprep.mubr.bf16.mxu0 0
    %1000 = vmatmul.mubr.bf16.gmra.mrb[0].mxu0 %v916
    %v1001 = vpop.f32.mrb[0].mxu0
    %v1002 = vadd.f32 %v637, %v1001
    %v1003 = vpop.f32.mrb[0].mxu0
    %v1004 = vpop.f32.mrb[0].mxu0
    %v1005 = vadd.f32 %v638, %v1004
    %v1006 = vpop.f32.mrb[0].mxu0
    %1007 = vmatprep.mubr.bf16.mxu0 0
    %1008 = vmatmul.mubr.bf16.gmra.mrb[0].mxu0 %v917
    %v1009 = vpop.f32.mrb[0].mxu0
    %v1010 = vadd.f32 %v639, %v1009
    %v1011 = vpop.f32.mrb[0].mxu0
    %v1012 = vpop.f32.mrb[0].mxu0
    %v1013 = vadd.f32 %v640, %v1012
    %v1014 = vpop.f32.mrb[0].mxu0
    %1015 = vmatprep.mubr.bf16.mxu0 0
    %1016 = vmatmul.mubr.bf16.gmra.mrb[0].mxu0 %v918
    %v1017 = vpop.f32.mrb[0].mxu0
    %v1018 = vadd.f32 %v641, %v1017
    %v1019 = vpop.f32.mrb[0].mxu0
    %v1020 = vpop.f32.mrb[0].mxu0
    %v1021 = vadd.f32 %v642, %v1020
    %v1022 = vpop.f32.mrb[0].mxu0
    %1023 = vdwg.mxu0
    %v1024 = vmax.f32 %v962, 0.0
    %v1025 = vmax.f32 %v965, 0.0
    %v1026 = vmax.f32 %v970, 0.0
    %v1027 = vmax.f32 %v973, 0.0
    %v1028 = vmax.f32 %v978, 0.0
    %v1029 = vmax.f32 %v981, 0.0
    %v1030 = vmax.f32 %v986, 0.0
    %v1031 = vmax.f32 %v989, 0.0
    %v1032 = vmax.f32 %v994, 0.0
    %v1033 = vmax.f32 %v997, 0.0
    %v1034 = vmax.f32 %v1002, 0.0
    %v1035 = vmax.f32 %v1005, 0.0
    %v1036 = vmax.f32 %v1010, 0.0
    %v1037 = vmax.f32 %v1013, 0.0
    %v1038 = vmax.f32 %v1018, 0.0
    %v1039 = vmax.f32 %v1021, 0.0
    %v1040 = vld [vmem:[%s5] sm:$0xf]
    %v1041 = vpack.c.bf16 %v1025, %v1024
    %v1042 = vpack.c.bf16 %v1027, %v1026
    %v1043 = vpack.c.bf16 %v1029, %v1028
    %v1044 = vpack.c.bf16 %v1031, %v1030
    %v1045 = vpack.c.bf16 %v1033, %v1032
    %v1046 = vpack.c.bf16 %v1035, %v1034
    %v1047 = vpack.c.bf16 %v1037, %v1036
    %v1048 = vpack.c.bf16 %v1039, %v1038
    %1049 = vmatprep.subr.bf16.mxu0 0
    %1050 = vmatpush1.bf16.msra.mxu0 %v1041
    %1051 = vmatprep.subr.bf16.mxu0 0
    %1052 = vmatpush1.bf16.msra.mxu0 %v1042
    %1053 = vmatprep.subr.bf16.mxu0 0
    %1054 = vmatpush1.bf16.msra.mxu0 %v1043
    %1055 = vmatprep.subr.bf16.mxu0 0
    %1056 = vmatpush1.bf16.msra.mxu0 %v1044
    %1057 = vmatprep.subr.bf16.mxu0 0
    %1058 = vmatpush1.bf16.msra.mxu0 %v1045
    %1059 = vmatprep.subr.bf16.mxu0 0
    %1060 = vmatpush1.bf16.msra.mxu0 %v1046
    %1061 = vmatprep.subr.bf16.mxu0 0
    %1062 = vmatpush1.bf16.msra.mxu0 %v1047
    %1063 = vmatprep.subr.bf16.mxu0 0
    %1064 = vmatpush1.bf16.msra.mxu0 %v1048
    %1065 = vmatprep.subr.bf16.mxu0 0
    %1066 = vmatpush1.bf16.msra.mxu0 0
    %1067 = vmatprep.subr.bf16.mxu0 0
    %1068 = vmatpush1.bf16.msra.mxu0 0
    %1069 = vmatprep.subr.bf16.mxu0 0
    %1070 = vmatpush1.bf16.msra.mxu0 0
    %1071 = vmatprep.subr.bf16.mxu0 0
    %1072 = vmatpush1.bf16.msra.mxu0 0
    %1073 = vmatprep.subr.bf16.mxu0 0
    %1074 = vmatpush1.bf16.msra.mxu0 0
    %1075 = vmatprep.subr.bf16.mxu0 0
    %1076 = vmatpush1.bf16.msra.mxu0 0
    %1077 = vmatprep.subr.bf16.mxu0 0
    %1078 = vmatpush1.bf16.msra.mxu0 0
    %1079 = vmatprep.subr.bf16.mxu0 0
    %1080 = vmatpush1.bf16.msra.mxu0 0
    %1081 = vmatprep.mubr.bf16.mxu0 0
    %1082 = vmatmul.mubr.bf16.gmra.mrb[0].mxu0 %v1040
    %v1083 = vpop.f32.mrb[0].mxu0
    %v1084 = vadd.f32 0.0, %v1083
    %v1085 = vpop.f32.mrb[0].mxu0
    %v1086 = vpop.f32.mrb[0].mxu0
    %v1087 = vpop.f32.mrb[0].mxu0
    %1088 = vdwg.mxu0
    %1089 = vst [vmem:[#allocation2 + $0x10] sm:$0xff] %v1084
    %v1090 = vld [vmem:[#allocation2] sm:$0xff]
    %v1091 = vld [vmem:[#allocation2 + $0x8] sm:$0xff]
    %v1092 = vld [vmem:[#allocation2 + $0x10] sm:$0xff]
    %v1093 = vpack.c.bf16 %v1090, %v1090
    %v1094 = vpack.c.bf16 %v1091, %v1091
    %v1095 = vpack.c.bf16 %v1092, %v1092
    %v1096 = vld [vmem:[#allocation6] sm:$0xf]
    %v1097 = vld [vmem:[#allocation6 + $0x4] sm:$0xf]
    %v1098 = vld [vmem:[#allocation6 + $0x8] sm:$0xf]
    %v1099 = vld [vmem:[#allocation6 + $0xc] sm:$0xf]
    %v1100 = vld [vmem:[#allocation6 + $0x10] sm:$0xf]
    %v1101 = vld [vmem:[#allocation6 + $0x14] sm:$0xf]
    %v1102 = vld [vmem:[#allocation6 + $0x18] sm:$0xf]
    %v1103 = vld [vmem:[#allocation6 + $0x1c] sm:$0xf]
    %v1104 = vld [vmem:[#allocation6 + $0x20] sm:$0xf]
    %v1105 = vld [vmem:[#allocation6 + $0x24] sm:$0xf]
    %v1106 = vld [vmem:[#allocation6 + $0x28] sm:$0xf]
    %v1107 = vld [vmem:[#allocation6 + $0x2c] sm:$0xf]
    %v1108 = vld [vmem:[#allocation6 + $0x30] sm:$0xf]
    %v1109 = vld [vmem:[#allocation6 + $0x34] sm:$0xf]
    %v1110 = vld [vmem:[#allocation6 + $0x38] sm:$0xf]
    %v1111 = vld [vmem:[#allocation6 + $0x3c] sm:$0xf]
    %v1112 = vld [vmem:[#allocation6 + $0x40] sm:$0xf]
    %v1113 = vld [vmem:[#allocation6 + $0x44] sm:$0xf]
    %v1114 = vld [vmem:[#allocation6 + $0x48] sm:$0xf]
    %v1115 = vld [vmem:[#allocation6 + $0x4c] sm:$0xf]
    %v1116 = vld [vmem:[#allocation6 + $0x50] sm:$0xf]
    %v1117 = vld [vmem:[#allocation6 + $0x54] sm:$0xf]
    %v1118 = vld [vmem:[#allocation6 + $0x58] sm:$0xf]
    %v1119 = vld [vmem:[#allocation6 + $0x5c] sm:$0xf]
    %v1120 = vld [vmem:[#allocation6 + $0x60] sm:$0xf]
    %v1121 = vld [vmem:[#allocation6 + $0x64] sm:$0xf]
    %v1122 = vld [vmem:[#allocation6 + $0x68] sm:$0xf]
    %v1123 = vld [vmem:[#allocation6 + $0x6c] sm:$0xf]
    %v1124 = vld [vmem:[#allocation6 + $0x70] sm:$0xf]
    %v1125 = vld [vmem:[#allocation6 + $0x74] sm:$0xf]
    %v1126 = vld [vmem:[#allocation6 + $0x78] sm:$0xf]
    %v1127 = vld [vmem:[#allocation6 + $0x7c] sm:$0xf]
    %v1128 = vld [vmem:[#allocation6 + $0x80] sm:$0xf]
    %v1129 = vld [vmem:[#allocation6 + $0x84] sm:$0xf]
    %v1130 = vld [vmem:[#allocation6 + $0x88] sm:$0xf]
    %v1131 = vld [vmem:[#allocation6 + $0x8c] sm:$0xf]
    %v1132 = vld [vmem:[#allocation6 + $0x90] sm:$0xf]
    %v1133 = vld [vmem:[#allocation6 + $0x94] sm:$0xf]
    %v1134 = vld [vmem:[#allocation6 + $0x98] sm:$0xf]
    %v1135 = vld [vmem:[#allocation6 + $0x9c] sm:$0xf]
    %v1136 = vld [vmem:[#allocation6 + $0xa0] sm:$0xf]
    %v1137 = vld [vmem:[#allocation6 + $0xa4] sm:$0xf]
    %v1138 = vld [vmem:[#allocation6 + $0xa8] sm:$0xf]
    %v1139 = vld [vmem:[#allocation6 + $0xac] sm:$0xf]
    %v1140 = vld [vmem:[#allocation6 + $0xb0] sm:$0xf]
    %v1141 = vld [vmem:[#allocation6 + $0xb4] sm:$0xf]
    %v1142 = vld [vmem:[#allocation6 + $0xb8] sm:$0xf]
    %v1143 = vld [vmem:[#allocation6 + $0xbc] sm:$0xf]
    %v1192 = vunpack.c.l.b16 %v1096
    %v1193 = vunpack.c.l.b16 %v1097
    %v1194 = vunpack.c.l.b16 %v1098
    %v1195 = vunpack.c.l.b16 %v1099
    %v1196 = vunpack.c.l.b16 %v1100
    %v1197 = vunpack.c.l.b16 %v1101
    %v1198 = vunpack.c.l.b16 %v1102
    %v1199 = vunpack.c.l.b16 %v1103
    %v1200 = vunpack.c.l.b16 %v1104
    %v1201 = vunpack.c.l.b16 %v1105
    %v1202 = vunpack.c.l.b16 %v1106
    %v1203 = vunpack.c.l.b16 %v1107
    %v1204 = vunpack.c.l.b16 %v1108
    %v1205 = vunpack.c.l.b16 %v1109
    %v1206 = vunpack.c.l.b16 %v1110
    %v1207 = vunpack.c.l.b16 %v1111
    %v1208 = vunpack.c.l.b16 %v1112
    %v1209 = vunpack.c.l.b16 %v1113
    %v1210 = vunpack.c.l.b16 %v1114
    %v1211 = vunpack.c.l.b16 %v1115
    %v1212 = vunpack.c.l.b16 %v1116
    %v1213 = vunpack.c.l.b16 %v1117
    %v1214 = vunpack.c.l.b16 %v1118
    %v1215 = vunpack.c.l.b16 %v1119
    %v1216 = vunpack.c.l.b16 %v1120
    %v1217 = vunpack.c.l.b16 %v1121
    %v1218 = vunpack.c.l.b16 %v1122
    %v1219 = vunpack.c.l.b16 %v1123
    %v1220 = vunpack.c.l.b16 %v1124
    %v1221 = vunpack.c.l.b16 %v1125
    %v1222 = vunpack.c.l.b16 %v1126
    %v1223 = vunpack.c.l.b16 %v1127
    %v1224 = vunpack.c.l.b16 %v1128
    %v1225 = vunpack.c.l.b16 %v1129
    %v1226 = vunpack.c.l.b16 %v1130
    %v1227 = vunpack.c.l.b16 %v1131
    %v1228 = vunpack.c.l.b16 %v1132
    %v1229 = vunpack.c.l.b16 %v1133
    %v1230 = vunpack.c.l.b16 %v1134
    %v1231 = vunpack.c.l.b16 %v1135
    %v1232 = vunpack.c.l.b16 %v1136
    %v1233 = vunpack.c.l.b16 %v1137
    %v1234 = vunpack.c.l.b16 %v1138
    %v1235 = vunpack.c.l.b16 %v1139
    %v1236 = vunpack.c.l.b16 %v1140
    %v1237 = vunpack.c.l.b16 %v1141
    %v1238 = vunpack.c.l.b16 %v1142
    %v1239 = vunpack.c.l.b16 %v1143
    %v1240 = vpack.c.b16 %v1193, %v1192
    %v1241 = vpack.c.b16 %v1195, %v1194
    %v1242 = vpack.c.b16 %v1197, %v1196
    %v1243 = vpack.c.b16 %v1199, %v1198
    %v1244 = vpack.c.b16 %v1201, %v1200
    %v1245 = vpack.c.b16 %v1203, %v1202
    %v1246 = vpack.c.b16 %v1205, %v1204
    %v1247 = vpack.c.b16 %v1207, %v1206
    %v1248 = vpack.c.b16 %v1209, %v1208
    %v1249 = vpack.c.b16 %v1211, %v1210
    %v1250 = vpack.c.b16 %v1213, %v1212
    %v1251 = vpack.c.b16 %v1215, %v1214
    %v1252 = vpack.c.b16 %v1217, %v1216
    %v1253 = vpack.c.b16 %v1219, %v1218
    %v1254 = vpack.c.b16 %v1221, %v1220
    %v1255 = vpack.c.b16 %v1223, %v1222
    %v1256 = vpack.c.b16 %v1225, %v1224
    %v1257 = vpack.c.b16 %v1227, %v1226
    %v1258 = vpack.c.b16 %v1229, %v1228
    %v1259 = vpack.c.b16 %v1231, %v1230
    %v1260 = vpack.c.b16 %v1233, %v1232
    %v1261 = vpack.c.b16 %v1235, %v1234
    %v1262 = vpack.c.b16 %v1237, %v1236
    %v1263 = vpack.c.b16 %v1239, %v1238
    %1288 = vmatprep.subr.bf16.mxu0 0
    %1289 = vmatpush1.bf16.msra.mxu0 %v1240
    %1290 = vmatprep.subr.bf16.mxu0 0
    %1291 = vmatpush1.bf16.msra.mxu0 %v1241
    %1292 = vmatprep.subr.bf16.mxu0 0
    %1293 = vmatpush1.bf16.msra.mxu0 %v1242
    %1294 = vmatprep.subr.bf16.mxu0 0
    %1295 = vmatpush1.bf16.msra.mxu0 %v1243
    %1296 = vmatprep.subr.bf16.mxu0 0
    %1297 = vmatpush1.bf16.msra.mxu0 %v1244
    %1298 = vmatprep.subr.bf16.mxu0 0
    %1299 = vmatpush1.bf16.msra.mxu0 %v1245
    %1300 = vmatprep.subr.bf16.mxu0 0
    %1301 = vmatpush1.bf16.msra.mxu0 %v1246
    %1302 = vmatprep.subr.bf16.mxu0 0
    %1303 = vmatpush1.bf16.msra.mxu0 %v1247
    %1304 = vmatprep.subr.bf16.mxu0 0
    %1305 = vmatpush1.bf16.msra.mxu0 %v1248
    %1306 = vmatprep.subr.bf16.mxu0 0
    %1307 = vmatpush1.bf16.msra.mxu0 %v1249
    %1308 = vmatprep.subr.bf16.mxu0 0
    %1309 = vmatpush1.bf16.msra.mxu0 %v1250
    %1310 = vmatprep.subr.bf16.mxu0 0
    %1311 = vmatpush1.bf16.msra.mxu0 %v1251
    %1312 = vmatprep.subr.bf16.mxu0 0
    %1313 = vmatpush1.bf16.msra.mxu0 %v1252
    %1314 = vmatprep.subr.bf16.mxu0 0
    %1315 = vmatpush1.bf16.msra.mxu0 %v1253
    %1316 = vmatprep.subr.bf16.mxu0 0
    %1317 = vmatpush1.bf16.msra.mxu0 %v1254
    %1318 = vmatprep.subr.bf16.mxu0 0
    %1319 = vmatpush1.bf16.msra.mxu0 %v1255
    %1320 = vmatprep.mubr.bf16.mxu0 %v1094
    %1321 = vmatmul.mubr.bf16.gmra.mrb[0].mxu0 %v1093
    %v1322 = vpop.f32.mrb[0].mxu0
    %v1323 = vadd.f32 0.0, %v1322
    %v1324 = vpop.f32.mrb[0].mxu0
    %v1325 = vpop.f32.mrb[0].mxu0
    %v1326 = vpop.f32.mrb[0].mxu0
    %1327 = vdwg.mxu0
    %1328 = vmatprep.subr.bf16.mxu0 0
    %1329 = vmatpush1.bf16.msra.mxu0 %v1256
    %1330 = vmatprep.subr.bf16.mxu0 0
    %1331 = vmatpush1.bf16.msra.mxu0 %v1257
    %1332 = vmatprep.subr.bf16.mxu0 0
    %1333 = vmatpush1.bf16.msra.mxu0 %v1258
    %1334 = vmatprep.subr.bf16.mxu0 0
    %1335 = vmatpush1.bf16.msra.mxu0 %v1259
    %1336 = vmatprep.subr.bf16.mxu0 0
    %1337 = vmatpush1.bf16.msra.mxu0 %v1260
    %1338 = vmatprep.subr.bf16.mxu0 0
    %1339 = vmatpush1.bf16.msra.mxu0 %v1261
    %1340 = vmatprep.subr.bf16.mxu0 0
    %1341 = vmatpush1.bf16.msra.mxu0 %v1262
    %1342 = vmatprep.subr.bf16.mxu0 0
    %1343 = vmatpush1.bf16.msra.mxu0 %v1263
    %1344 = vmatprep.subr.bf16.mxu0 0
    %1345 = vmatpush1.bf16.msra.mxu0 0
    %1346 = vmatprep.subr.bf16.mxu0 0
    %1347 = vmatpush1.bf16.msra.mxu0 0
    %1348 = vmatprep.subr.bf16.mxu0 0
    %1349 = vmatpush1.bf16.msra.mxu0 0
    %1350 = vmatprep.subr.bf16.mxu0 0
    %1351 = vmatpush1.bf16.msra.mxu0 0
    %1352 = vmatprep.subr.bf16.mxu0 0
    %1353 = vmatpush1.bf16.msra.mxu0 0
    %1354 = vmatprep.subr.bf16.mxu0 0
    %1355 = vmatpush1.bf16.msra.mxu0 0
    %1356 = vmatprep.subr.bf16.mxu0 0
    %1357 = vmatpush1.bf16.msra.mxu0 0
    %1358 = vmatprep.subr.bf16.mxu0 0
    %1359 = vmatpush1.bf16.msra.mxu0 0
    %1360 = vmatprep.mubr.bf16.mxu0 0
    %1361 = vmatmul.mubr.bf16.gmra.mrb[0].mxu0 %v1095
    %v1362 = vpop.f32.mrb[0].mxu0
    %v1363 = vadd.f32 %v1323, %v1362
    %v1364 = vpop.f32.mrb[0].mxu0
    %v1365 = vpop.f32.mrb[0].mxu0
    %v1366 = vpop.f32.mrb[0].mxu0
    %1367 = vdwg.mxu0
    %1368 = vst [vmem:[#allocation8] sm:$0xff] %v1363
    // Predicated region
    $region34: #{tpu_custom_call.1} parent=1 // pred_check
      _
    $region35: #{tpu_custom_call.1} parent=1 // pred_check_branch
      %1370 = sbr.rel (0) target = $region37
    $region36: #{tpu_custom_call.1} parent=1 // pred_region
      %s1372 = ssub.s32 128, 128
      %1373 = vsyncadd [#allocation5], %s1372
      %s1375 = sshll.u32 [#allocation8], 4
      %s1376 = int_to_ptr.vmem [resolvable:$true] %s1375
      %1378 = dma.vmem_to_hbm [thread:$0]  %s1376, 128, %s6, [#allocation5]
    $region37: #{tpu_custom_call.1} parent=1 // pred_fallthru
      _
    // Predicated region
    $region38: #{tpu_custom_call.1} parent=1 // pred_check
      _
    $region39: #{tpu_custom_call.1} parent=1 // pred_check_branch
      %1380 = sbr.rel (0) target = $region41
    $region40: #{tpu_custom_call.1} parent=1 // pred_region
      %1381 = dma.done [#allocation5], 128
    $region41: #{tpu_custom_call.1} parent=1 // pred_fallthru
      _
    %1382 = vsyncpa [#allocation4], 1
    %1383 = vsyncpa [#allocation7], 1
    %1384 = vsyncpa [#allocation5], 1

</llo_original>
